<compile_context>
chip_gen: v7x
topology: tpu7x:2x2x1
jax: 0.10.0
libtpu: 0.0.40
codegen_flags: <defaults>
</compile_context>

<pallas_src>
import functools

import jax
import jax.numpy as jnp
from jax.experimental import pallas as pl
from jax.experimental.pallas import tpu as pltpu


def _resnet_block_kernel(xw_ref, w3_ref, b3_ref, w12_ref, bc_ref, o_ref, *,
                         dilation, tile_t, n_batch, channels):
    """One time-tile (all batch elements at once) per grid step.

    xw_ref : (N, 1, tile_t + 2*dilation, C)  reflection-padded halo window (matmul dtype)
    w3_ref : (3*C, C)  dilated k=3 conv, taps stacked along the contraction axis
    b3_ref : (1, C)    f32 bias of the dilated conv
    w12_ref: (2*C, C)  [block 1x1 ; shortcut 1x1] stacked along the contraction axis
    bc_ref : (1, C)    f32 combined bias (b1 + bs)
    o_ref  : (N, tile_t, C)
    """
    d, tt, n, c = dilation, tile_t, n_batch, channels
    rows = n * tt

    xw = jnp.squeeze(xw_ref[...], axis=1)              # (N, tt + 2d, C)

    # Shortcut operand: raw interior of the padded window, sliced BEFORE the LeakyReLU.
    x_raw = xw[:, d:d + tt, :].reshape(rows, c)

    # LeakyReLU(0.2).  Reflection pad is a pure index copy, so leaky(pad(x)) == pad(leaky(x)).
    h = jnp.where(xw > 0, xw, 0.2 * xw)

    # Dilated k=3 conv: gather the 3 taps on the lane axis -> one MXU matmul with K = 3C.
    h3 = jnp.concatenate(
        [h[:, 0:tt, :], h[:, d:d + tt, :], h[:, 2 * d:2 * d + tt, :]], axis=-1)
    acc = jnp.dot(h3.reshape(rows, 3 * c), w3_ref[...],
                  preferred_element_type=jnp.float32) + b3_ref[...]

    # Second LeakyReLU in f32.
    a = jnp.where(acc > 0, acc, 0.2 * acc)

    # Fused block-1x1 + shortcut-1x1:  [a | x] @ [[W1],[Ws]] + (b1 + bs).
    cat = jnp.concatenate([a.astype(xw.dtype), x_raw], axis=-1)      # (rows, 2C)
    out = jnp.dot(cat, w12_ref[...], preferred_element_type=jnp.float32) + bc_ref[...]

    o_ref[...] = out.reshape(n, tt, c).astype(o_ref.dtype)


def _weight_norm(v, g):
    # PyTorch weight_norm (dim=0): w = g * v / ||v||, norm over (in, kernel) per out channel.
    norm = jnp.sqrt(jnp.sum(v * v, axis=(1, 2), keepdims=True))
    return g * v / norm


def resnet_block(x_nct, params, dilation, *, matmul_dtype=jnp.bfloat16, tile_t=512):
    """MelGAN ResnetBlock forward.  x_nct: (N, C, T) float32, PyTorch NCT layout."""
    N, C, T = x_nct.shape
    d = int(dilation)
    assert d < T, "ReflectionPad1d requires dilation < T"

    # ---- weight-norm folding + fused weight layout (glue, pure reindexing) ----
    w3_oik = _weight_norm(params["v3"], params["g3"])        # (Cout, Cin, 3)
    w1_oik = _weight_norm(params["v1"], params["g1"])        # (Cout, Cin, 1)
    ws_oik = _weight_norm(params["vs"], params["gs"])        # (Cout, Cin, 1)

    # tap k -> (Cin, Cout), taps stacked along the contraction axis: (3C, C)
    w3 = jnp.transpose(w3_oik, (2, 1, 0)).reshape(3 * C, C).astype(matmul_dtype)
    # [block 1x1 ; shortcut 1x1] stacked along the contraction axis: (2C, C)
    w12 = jnp.concatenate(
        [w1_oik[:, :, 0].T, ws_oik[:, :, 0].T], axis=0).astype(matmul_dtype)
    b3 = params["b3"].reshape(1, C).astype(jnp.float32)
    bc = (params["b1"] + params["bs"]).reshape(1, C).astype(jnp.float32)   # folded bias

    # ---- time tiling: tile_t multiple of 8 sublanes, halo of 2*d ----
    tile_t = int(min(int(tile_t), pl.cdiv(T, 8) * 8))
    tile_t = max(8, (tile_t // 8) * 8)
    n_tiles = pl.cdiv(T, tile_t)
    t_pad = n_tiles * tile_t
    tw = tile_t + 2 * d

    # Reflection padding + per-tile halo windows built with ONE gather (pure index copy).
    p = (jnp.arange(n_tiles) * tile_t)[:, None] + jnp.arange(tw)[None, :]  # padded positions
    q = p - d
    r = jnp.where(q < 0, -q, jnp.where(q >= T, 2 * (T - 1) - q, q))
    r = jnp.clip(r, 0, T - 1)                                              # clamp tail padding

    # TODO(synk): if the surrounding MelGAN stack stays in NTC, this transpose (and the one on
    # the way out) disappears and only the halo-window gather remains.
    x_ntc = jnp.transpose(x_nct, (0, 2, 1)).astype(matmul_dtype)           # (N, T, C)
    x_win = x_ntc[:, r, :]                                                 # (N, n_tiles, tw, C)

    # ---- explicit VMEM budget: double-buffered window + output + resident weights + headroom
    in_b = jnp.dtype(matmul_dtype).itemsize
    out_b = jnp.dtype(x_nct.dtype).itemsize
    est = (2 * N * tw * C * in_b            # double-buffered input window
           + 2 * N * tile_t * C * out_b     # double-buffered output tile
           + 5 * C * C * in_b + 2 * C * 4   # resident fused weights + biases
           + 10 * N * tile_t * C * 4)       # f32 intermediates headroom
    vmem_limit = int(min(max(est, 16 * 2 ** 20), 48 * 2 ** 20))  # <=48 MiB: safe on v7x (64 MiB VMEM)

    kernel = functools.partial(_resnet_block_kernel, dilation=d, tile_t=tile_t,
                               n_batch=N, channels=C)

    out_ntc = pl.pallas_call(
        kernel,
        out_shape=jax.ShapeDtypeStruct((N, t_pad, C), x_nct.dtype),
        grid_spec=pltpu.PrefetchScalarGridSpec(
            num_scalar_prefetch=0,
            grid=(n_tiles,),
            in_specs=[
                pl.BlockSpec((N, 1, tw, C), lambda t: (0, t, 0, 0)),   # padded halo window
                pl.BlockSpec((3 * C, C), lambda t: (0, 0)),            # fused dilated-conv weight
                pl.BlockSpec((1, C), lambda t: (0, 0)),                # b3
                pl.BlockSpec((2 * C, C), lambda t: (0, 0)),            # fused 1x1 weights
                pl.BlockSpec((1, C), lambda t: (0, 0)),                # b1 + bs
            ],
            out_specs=pl.BlockSpec((N, tile_t, C), lambda t: (0, t, 0)),
        ),
        compiler_params=pltpu.CompilerParams(
            dimension_semantics=("parallel",),
            vmem_limit_bytes=vmem_limit),
    )(x_win, w3, b3, w12, bc)

    # Drop the tail padding, NTC -> NCT to match the PyTorch output layout.
    return jnp.transpose(out_ntc[:, :T, :], (0, 2, 1))


def resnet_block_ref(x_nct, params, dilation):
    """Plain-JAX f32 reference mirroring the PyTorch forward."""
    d = dilation
    w3 = _weight_norm(params["v3"], params["g3"])
    w1 = _weight_norm(params["v1"], params["g1"])
    ws = _weight_norm(params["vs"], params["gs"])

    def leaky(v):
        return jnp.where(v > 0, v, 0.2 * v)

    def conv1d(x, w, b, dil):
        out = jax.lax.conv_general_dilated(
            x, w, window_strides=(1,), padding="VALID", rhs_dilation=(dil,),
            dimension_numbers=("NCH", "OIH", "NCH"))
        return out + b[None, :, None]

    h = leaky(x_nct)
    h = jnp.pad(h, ((0, 0), (0, 0), (d, d)), mode="reflect")
    h = conv1d(h, w3, params["b3"], d)
    h = leaky(h)
    h = conv1d(h, w1, params["b1"], 1)
    s = conv1d(x_nct, ws, params["bs"], 1)
    return s + h


def init_params(key, dim):
    ks = jax.random.split(key, 9)
    scale = 0.1

    def g_init(v, k):
        n = jnp.sqrt(jnp.sum(v * v, axis=(1, 2), keepdims=True))
        return n * (1.0 + 0.05 * jax.random.normal(k, n.shape, jnp.float32))

    v3 = scale * jax.random.normal(ks[0], (dim, dim, 3), jnp.float32)
    v1 = scale * jax.random.normal(ks[1], (dim, dim, 1), jnp.float32)
    vs = scale * jax.random.normal(ks[2], (dim, dim, 1), jnp.float32)
    return {
        "v3": v3, "g3": g_init(v3, ks[3]),
        "b3": scale * jax.random.normal(ks[6], (dim,), jnp.float32),
        "v1": v1, "g1": g_init(v1, ks[4]),
        "b1": scale * jax.random.normal(ks[7], (dim,), jnp.float32),
        "vs": vs, "gs": g_init(vs, ks[5]),
        "bs": scale * jax.random.normal(ks[8], (dim,), jnp.float32),
    }


if __name__ == "__main__":
    root = jax.random.PRNGKey(0)
    k_x, k_x2, k_p = jax.random.split(root, 3)

    N, C, T = 2, 128, 64            # batch, channels (a real MelGAN block width), time
    x = jax.random.normal(k_x, (N, C, T), jnp.float32)
    params = init_params(k_p, C)

    checks = [
        # (dilation, tile_t, matmul_dtype, atol, rtol)
        (1, 32, jnp.float32, 1e-4, 1e-4),     # multi-tile time axis (halo = 2)
        (3, 512, jnp.float32, 1e-4, 1e-4),    # single tile, dilated halo = 6
        (3, 512, jnp.bfloat16, 1e-1, 5e-2),   # fast path: bf16 MXU operands, f32 accumulation
    ]
    for d, tt, mdt, atol, rtol in checks:
        ref = resnet_block_ref(x, params, d)
        out = jax.block_until_ready(
            resnet_block(x, params, d, matmul_dtype=mdt, tile_t=tt))
        assert out.shape == (N, C, T)
        err = float(jnp.max(jnp.abs(out - ref)))
        assert jnp.allclose(out, ref, atol=atol, rtol=rtol), (
            f"mismatch d={d} tile_t={tt} dtype={mdt}: max abs err {err}")

    # Ragged time length (T not a multiple of tile_t) exercises the tail-padding path.
    T2 = 72
    x2 = jax.random.normal(k_x2, (1, C, T2), jnp.float32)
    ref2 = resnet_block_ref(x2, params, 3)
    out2 = jax.block_until_ready(
        resnet_block(x2, params, 3, matmul_dtype=jnp.float32, tile_t=32))
    assert out2.shape == (1, C, T2)
    assert jnp.allclose(out2, ref2, atol=1e-4, rtol=1e-4), (
        f"ragged mismatch: max abs err {float(jnp.max(jnp.abs(out2 - ref2)))}")

    print("KERNEL_OK")
</pallas_src>

<mosaic_0001>
module attributes {stable_mosaic.version = 11 : i64} {
  func.func @_resnet_block_kernel(%arg0: i32, %arg1: memref<2x1x34x128xf32, #tpu.memory_space<vmem>>, %arg2: memref<384x128xf32, #tpu.memory_space<vmem>>, %arg3: memref<1x128xf32, #tpu.memory_space<vmem>>, %arg4: memref<256x128xf32, #tpu.memory_space<vmem>>, %arg5: memref<1x128xf32, #tpu.memory_space<vmem>>, %arg6: memref<2x32x128xf32, #tpu.memory_space<vmem>>) attributes {dimension_semantics = [#tpu.dimension_semantics<parallel>], iteration_bounds = array<i64: 2>, scalar_prefetch = 0 : i64, scratch_operands = 0 : i64, tpu.core_type = #tpu.core_type<tc>, window_params = [{transform_indices = @transform_0, window_bounds = array<i64: 2, 1, 34, 128>}, {pipeline_mode = #tpu.pipeline_mode<synchronous>, transform_indices = @transform_1, window_bounds = array<i64: 384, 128>}, {pipeline_mode = #tpu.pipeline_mode<synchronous>, transform_indices = @transform_2, window_bounds = array<i64: 1, 128>}, {pipeline_mode = #tpu.pipeline_mode<synchronous>, transform_indices = @transform_3, window_bounds = array<i64: 256, 128>}, {pipeline_mode = #tpu.pipeline_mode<synchronous>, transform_indices = @transform_4, window_bounds = array<i64: 1, 128>}, {transform_indices = @transform_5, window_bounds = array<i64: 2, 32, 128>}]} {
    %c0 = arith.constant 0 : index
    %c0_0 = arith.constant 0 : index
    %c0_1 = arith.constant 0 : index
    %c0_2 = arith.constant 0 : index
    %0 = vector.load %arg1[%c0, %c0_0, %c0_1, %c0_2] : memref<2x1x34x128xf32, #tpu.memory_space<vmem>>, vector<2x1x34x128xf32>
    %1 = vector.shape_cast %0 : vector<2x1x34x128xf32> to vector<2x34x128xf32>
    %2 = vector.extract_strided_slice %1 {offsets = [0, 1, 0], sizes = [2, 32, 128], strides = [1, 1, 1]} : vector<2x34x128xf32> to vector<2x32x128xf32>
    %3 = vector.shape_cast %2 : vector<2x32x128xf32> to vector<64x128xf32>
    %cst = arith.constant 0.000000e+00 : f32
    %4 = vector.broadcast %cst : f32 to vector<2x34x128xf32>
    %5 = arith.cmpf ogt, %1, %4 : vector<2x34x128xf32>
    %cst_3 = arith.constant 2.000000e-01 : f32
    %6 = vector.broadcast %cst_3 : f32 to vector<2x34x128xf32>
    %7 = arith.mulf %6, %1 : vector<2x34x128xf32>
    %8 = arith.select %5, %1, %7 : vector<2x34x128xi1>, vector<2x34x128xf32>
    %9 = vector.extract_strided_slice %8 {offsets = [0, 0, 0], sizes = [2, 32, 128], strides = [1, 1, 1]} : vector<2x34x128xf32> to vector<2x32x128xf32>
    %10 = vector.extract_strided_slice %8 {offsets = [0, 1, 0], sizes = [2, 32, 128], strides = [1, 1, 1]} : vector<2x34x128xf32> to vector<2x32x128xf32>
    %11 = vector.extract_strided_slice %8 {offsets = [0, 2, 0], sizes = [2, 32, 128], strides = [1, 1, 1]} : vector<2x34x128xf32> to vector<2x32x128xf32>
    %12 = tpu.concatenate %9, %10, %11 in 2 : vector<2x32x128xf32>, vector<2x32x128xf32>, vector<2x32x128xf32> -> vector<2x32x384xf32>
    %13 = vector.shape_cast %12 : vector<2x32x384xf32> to vector<64x384xf32>
    %c0_4 = arith.constant 0 : index
    %c0_5 = arith.constant 0 : index
    %14 = vector.load %arg2[%c0_4, %c0_5] : memref<384x128xf32, #tpu.memory_space<vmem>>, vector<384x128xf32>
    %cst_6 = arith.constant dense<0.000000e+00> : vector<64x128xf32>
    %15 = tpu.matmul %13, %14, %cst_6 {dimension_numbers = #tpu.dot_dimension_numbers<[1], [0], [0], [1], [0, 0, 1, 1], [], []>} : vector<64x384xf32>, vector<384x128xf32>, vector<64x128xf32> -> vector<64x128xf32>
    %c0_7 = arith.constant 0 : index
    %c0_8 = arith.constant 0 : index
    %16 = vector.load %arg3[%c0_7, %c0_8] : memref<1x128xf32, #tpu.memory_space<vmem>>, vector<1x128xf32>
    %17 = vector.broadcast %16 : vector<1x128xf32> to vector<64x128xf32>
    %18 = arith.addf %15, %17 : vector<64x128xf32>
    %cst_9 = arith.constant 0.000000e+00 : f32
    %19 = vector.broadcast %cst_9 : f32 to vector<64x128xf32>
    %20 = arith.cmpf ogt, %18, %19 : vector<64x128xf32>
    %cst_10 = arith.constant 2.000000e-01 : f32
    %21 = vector.broadcast %cst_10 : f32 to vector<64x128xf32>
    %22 = arith.mulf %21, %18 : vector<64x128xf32>
    %23 = arith.select %20, %18, %22 : vector<64x128xi1>, vector<64x128xf32>
    %24 = tpu.concatenate %23, %3 in 1 : vector<64x128xf32>, vector<64x128xf32> -> vector<64x256xf32>
    %c0_11 = arith.constant 0 : index
    %c0_12 = arith.constant 0 : index
    %25 = vector.load %arg4[%c0_11, %c0_12] : memref<256x128xf32, #tpu.memory_space<vmem>>, vector<256x128xf32>
    %cst_13 = arith.constant dense<0.000000e+00> : vector<64x128xf32>
    %26 = tpu.matmul %24, %25, %cst_13 {dimension_numbers = #tpu.dot_dimension_numbers<[1], [0], [0], [1], [0, 0, 1, 1], [], []>} : vector<64x256xf32>, vector<256x128xf32>, vector<64x128xf32> -> vector<64x128xf32>
    %c0_14 = arith.constant 0 : index
    %c0_15 = arith.constant 0 : index
    %27 = vector.load %arg5[%c0_14, %c0_15] : memref<1x128xf32, #tpu.memory_space<vmem>>, vector<1x128xf32>
    %28 = vector.broadcast %27 : vector<1x128xf32> to vector<64x128xf32>
    %29 = arith.addf %26, %28 : vector<64x128xf32>
    %30 = vector.shape_cast %29 : vector<64x128xf32> to vector<2x32x128xf32>
    %c0_16 = arith.constant 0 : index
    %c0_17 = arith.constant 0 : index
    %c0_18 = arith.constant 0 : index
    %31 = vector.load %arg6[%c0_16, %c0_17, %c0_18] : memref<2x32x128xf32, #tpu.memory_space<vmem>>, vector<2x32x128xf32>
    tpu.vector_store %arg6[%c0_16, %c0_17, %c0_18], %30 {strides = array<i32>} : memref<2x32x128xf32, #tpu.memory_space<vmem>>, vector<2x32x128xf32>,
    return
  }
  func.func @transform_0(%arg0: i32) -> (i32, i32, i32, i32) {
    %c0_i32 = arith.constant 0 : i32
    %c0_i32_0 = arith.constant 0 : i32
    %c0_i32_1 = arith.constant 0 : i32
    %c0_i32_2 = arith.constant 0 : i32
    return %c0_i32, %arg0, %c0_i32_0, %c0_i32_1 : i32, i32, i32, i32
  }
  func.func @transform_1(%arg0: i32) -> (i32, i32) {
    %c0_i32 = arith.constant 0 : i32
    %c0_i32_0 = arith.constant 0 : i32
    %c0_i32_1 = arith.constant 0 : i32
    return %c0_i32, %c0_i32_0 : i32, i32
  }
  func.func @transform_2(%arg0: i32) -> (i32, i32) {
    %c0_i32 = arith.constant 0 : i32
    %c0_i32_0 = arith.constant 0 : i32
    %c0_i32_1 = arith.constant 0 : i32
    return %c0_i32, %c0_i32_0 : i32, i32
  }
  func.func @transform_3(%arg0: i32) -> (i32, i32) {
    %c0_i32 = arith.constant 0 : i32
    %c0_i32_0 = arith.constant 0 : i32
    %c0_i32_1 = arith.constant 0 : i32
    return %c0_i32, %c0_i32_0 : i32, i32
  }
  func.func @transform_4(%arg0: i32) -> (i32, i32) {
    %c0_i32 = arith.constant 0 : i32
    %c0_i32_0 = arith.constant 0 : i32
    %c0_i32_1 = arith.constant 0 : i32
    return %c0_i32, %c0_i32_0 : i32, i32
  }
  func.func @transform_5(%arg0: i32) -> (i32, i32, i32) {
    %c0_i32 = arith.constant 0 : i32
    %c0_i32_0 = arith.constant 0 : i32
    %c0_i32_1 = arith.constant 0 : i32
    return %c0_i32, %arg0, %c0_i32_0 : i32, i32, i32
  }
}

</mosaic_0001>

<llo_original>
// kernel: tpu_custom_call.1
$region0: #{tpu_custom_call.1}
  #allocation0 [shape = 'u32[]', space=smem, size = 0x4, offset = 0x4, fixed_abs, tag = 'smem constant byte address 0x4 - core index']
  #allocation1 [shape = 'u32[144,128]{1,0:T(1,128)}', space=vmem, size = 0x12000, scoped, tag = 'internal scratch']
  #allocation7 [shape = 's32[]', space=sflag, size = 0x4, offset = 0, fixed_abs, tag = 'sflag constant byte address 0x0 - dummy sync flag']
  %s0 = inlined_call_operand.vmem [shape: f32[2,2,34,128], index: 0, kind: input, shape index: {}]
  %s1 = inlined_call_operand.hbm [shape: f32[384,128], index: 1, kind: input, shape index: {}]
  %s2 = inlined_call_operand.vmem [shape: f32[1,128], index: 2, kind: input, shape index: {}]
  %s3 = inlined_call_operand.vmem [shape: f32[256,128], index: 3, kind: input, shape index: {}]
  %s4 = inlined_call_operand.vmem [shape: f32[1,128], index: 4, kind: input, shape index: {}]
  %s5 = inlined_call_operand.hbm [shape: f32[2,64,128], index: 5, kind: output, shape index: {}]
  %s6 = sld [smem:[#allocation0]]
  $region95: #{tpu_custom_call.1} parent=0
    _
  %s8 = ssub.s32 1, %s6
  %s9 = scalar_select 0, %s8, %s6
  $region1: #{tpu_custom_call.1} parent=0
    #allocation2 [shape = 'u8[81920]{0}', space=vmem, size = 0x14000, scoped, tag = 'input window, operand 0']
    #allocation3 [shape = 'u8[196608]{0}', space=vmem, size = 0x30000, scoped, tag = 'input window, operand 1, single buffered']
    #allocation4 [shape = 's32[2]{0}', space=sflag, size = 0x8, scoped, tag = 'scoped memory for tpu_custom_call.1']
    #allocation5 [shape = 's32[2]{0}', space=sflag, size = 0x8, scoped, tag = 'scoped memory for tpu_custom_call.1']
    #allocation6 [shape = 'u8[65536]{0}', space=vmem, size = 0x10000, scoped, tag = 'output window, operand 0']
    %10 = vsyncpa [#allocation4], 0
    %11 = vsyncpa [#allocation5], 0
    %s12 = scalar_lea.sflag [#allocation5], 1
    %13 = vsyncpa %s12, 0
    loop: start=0, step=1, limit=4
    $region2: #{tpu_custom_call.1} parent=1 // loop_pre_header
      _
    $region3: #{tpu_custom_call.1} parent=1 // loop_header
      %s15 = sphi 0, %s19
      %p16 = scmp.ge.s32.totalorder %s15, 4
      %s25 = sphi 0, %s27
      %s28 = sphi 0, %s25
      %s29 = sphi 0, %s28
      %s45 = sphi 0, %s29
      %s49 = sphi 0, %s49
      %s51 = sphi 0, %s49
      %s52 = sphi 0, %s51
      %s66 = sphi 0, %s52
      %s70 = sphi 0, %s70
      %s72 = sphi 0, %s70
      %s73 = sphi 0, %s72
      %s87 = sphi 0, %s73
      %s91 = sphi 0, %s91
      %s93 = sphi 0, %s91
      %s94 = sphi 0, %s93
      %s108 = sphi 0, %s94
      %s112 = sphi 0, %s112
      %s114 = sphi 0, %s112
      %s115 = sphi 0, %s114
      %s129 = sphi 0, %s115
      %s135 = sphi 0, %s137
      %s138 = sphi 0, %s135
      %s139 = sphi 0, %s138
      %s155 = sphi 0, %s139
    $region4: #{tpu_custom_call.1} parent=1 // loop_header_branch
      %18 = sbr.rel (%p16) target = $region8
    $region5: #{tpu_custom_call.1} parent=1 // loop_body
      %s20 = ssub.s32 %s15, 1
      %s21 = ssub.s32 %s15, 2
      %s22 = sadd.s32 %s15, 1
      %s23 = ssub.s32 %s15, %s22
      %p24 = scmp.eq.s32.totalorder %s23, 0
      %s26 = sadd.s32 %s25, 1
      %s27 = scalar_select %p24, %s25, %s26
      %p30 = pneg %p24
      %p31 = scmp.eq.s32.totalorder %s15, 1
      %p32 = por %p30, %p31
      %p33 = scmp.ne.s32.totalorder %s25, %s28
      %p34 = scmp.eq.s32.totalorder %s15, 0
      %p35 = por %p33, %p34
      %p36 = scmp.ne.s32.totalorder %s25, %s28
      %p37 = scmp.eq.s32.totalorder %s20, 1
      %p38 = por %p36, %p37
      %p39 = scmp.ne.s32.totalorder %s28, %s29
      %p40 = scmp.eq.s32.totalorder %s20, 0
      %p41 = por %p39, %p40
      %p42 = scmp.ne.s32.totalorder %s28, %s29
      %p43 = scmp.eq.s32.totalorder %s21, 1
      %p44 = por %p42, %p43
      %p46 = scmp.ne.s32.totalorder %s29, %s45
      %p47 = scmp.eq.s32.totalorder %s21, 0
      %p48 = por %p46, %p47
      %s50 = sadd.s32 %s49, 1
      %p53 = scmp.eq.s32.totalorder %s15, 1
      %p54 = scmp.ne.s32.totalorder %s49, %s51
      %p55 = scmp.eq.s32.totalorder %s15, 0
      %p56 = por %p54, %p55
      %p57 = scmp.ne.s32.totalorder %s49, %s51
      %p58 = scmp.eq.s32.totalorder %s20, 1
      %p59 = por %p57, %p58
      %p60 = scmp.ne.s32.totalorder %s51, %s52
      %p61 = scmp.eq.s32.totalorder %s20, 0
      %p62 = por %p60, %p61
      %p63 = scmp.ne.s32.totalorder %s51, %s52
      %p64 = scmp.eq.s32.totalorder %s21, 1
      %p65 = por %p63, %p64
      %p67 = scmp.ne.s32.totalorder %s52, %s66
      %p68 = scmp.eq.s32.totalorder %s21, 0
      %p69 = por %p67, %p68
      %s71 = sadd.s32 %s70, 1
      %p74 = scmp.eq.s32.totalorder %s15, 1
      %p75 = scmp.ne.s32.totalorder %s70, %s72
      %p76 = scmp.eq.s32.totalorder %s15, 0
      %p77 = por %p75, %p76
      %p78 = scmp.ne.s32.totalorder %s70, %s72
      %p79 = scmp.eq.s32.totalorder %s20, 1
      %p80 = por %p78, %p79
      %p81 = scmp.ne.s32.totalorder %s72, %s73
      %p82 = scmp.eq.s32.totalorder %s20, 0
      %p83 = por %p81, %p82
      %p84 = scmp.ne.s32.totalorder %s72, %s73
      %p85 = scmp.eq.s32.totalorder %s21, 1
      %p86 = por %p84, %p85
      %p88 = scmp.ne.s32.totalorder %s73, %s87
      %p89 = scmp.eq.s32.totalorder %s21, 0
      %p90 = por %p88, %p89
      %s92 = sadd.s32 %s91, 1
      %p95 = scmp.eq.s32.totalorder %s15, 1
      %p96 = scmp.ne.s32.totalorder %s91, %s93
      %p97 = scmp.eq.s32.totalorder %s15, 0
      %p98 = por %p96, %p97
      %p99 = scmp.ne.s32.totalorder %s91, %s93
      %p100 = scmp.eq.s32.totalorder %s20, 1
      %p101 = por %p99, %p100
      %p102 = scmp.ne.s32.totalorder %s93, %s94
      %p103 = scmp.eq.s32.totalorder %s20, 0
      %p104 = por %p102, %p103
      %p105 = scmp.ne.s32.totalorder %s93, %s94
      %p106 = scmp.eq.s32.totalorder %s21, 1
      %p107 = por %p105, %p106
      %p109 = scmp.ne.s32.totalorder %s94, %s108
      %p110 = scmp.eq.s32.totalorder %s21, 0
      %p111 = por %p109, %p110
      %s113 = sadd.s32 %s112, 1
      %p116 = scmp.eq.s32.totalorder %s15, 1
      %p117 = scmp.ne.s32.totalorder %s112, %s114
      %p118 = scmp.eq.s32.totalorder %s15, 0
      %p119 = por %p117, %p118
      %p120 = scmp.ne.s32.totalorder %s112, %s114
      %p121 = scmp.eq.s32.totalorder %s20, 1
      %p122 = por %p120, %p121
      %p123 = scmp.ne.s32.totalorder %s114, %s115
      %p124 = scmp.eq.s32.totalorder %s20, 0
      %p125 = por %p123, %p124
      %p126 = scmp.ne.s32.totalorder %s114, %s115
      %p127 = scmp.eq.s32.totalorder %s21, 1
      %p128 = por %p126, %p127
      %p130 = scmp.ne.s32.totalorder %s115, %s129
      %p131 = scmp.eq.s32.totalorder %s21, 0
      %p132 = por %p130, %p131
      %s133 = ssub.s32 %s15, %s22
      %p134 = scmp.eq.s32.totalorder %s133, 0
      %s136 = sadd.s32 %s135, 1
      %s137 = scalar_select %p134, %s135, %s136
      %p140 = pneg %p134
      %p141 = scmp.eq.s32.totalorder %s15, 1
      %p142 = por %p140, %p141
      %p143 = scmp.ne.s32.totalorder %s135, %s138
      %p144 = scmp.eq.s32.totalorder %s15, 0
      %p145 = por %p143, %p144
      %p146 = scmp.ne.s32.totalorder %s135, %s138
      %p147 = scmp.eq.s32.totalorder %s20, 1
      %p148 = por %p146, %p147
      %p149 = scmp.ne.s32.totalorder %s138, %s139
      %p150 = scmp.eq.s32.totalorder %s20, 0
      %p151 = por %p149, %p150
      %p152 = scmp.ne.s32.totalorder %s138, %s139
      %p153 = scmp.eq.s32.totalorder %s21, 1
      %p154 = por %p152, %p153
      %p156 = scmp.ne.s32.totalorder %s139, %s155
      %p157 = scmp.eq.s32.totalorder %s21, 0
      %p158 = por %p156, %p157
      %p159 = scmp.le.s32.totalorder 1, %s15
      %p160 = scmp.lt.s32.totalorder %s15, 3
      %p161 = pnand %p159, %p160
      %p162 = pneg %p161
      // Predicated region
      $region9: #{tpu_custom_call.1} parent=5 // pred_check
        _
      $region10: #{tpu_custom_call.1} parent=5 // pred_check_branch
        %164 = sbr.rel (%p161) target = $region12
      $region11: #{tpu_custom_call.1} parent=5 // pred_region
        %s165 = ssub.s32 %s15, 1
        // Predicated region
        $region13: #{tpu_custom_call.1} parent=11 // pred_check
          %p166 = pneg %p62
        $region14: #{tpu_custom_call.1} parent=11 // pred_check_branch
          %168 = sbr.rel (%p166) target = $region16
        $region15: #{tpu_custom_call.1} parent=11 // pred_region
          %s170 = ssub.s32 6144, 6144
          %171 = vsyncadd [#allocation4], %s170
          %s172 = sshll.u32 [#allocation3], 4
          %s173 = int_to_ptr.vmem [resolvable:$true] %s172
          %178 = dma.hbm_to_vmem [thread:$0]  %s1, 6144, %s173, [#allocation4], 128, 128, 8
        $region16: #{tpu_custom_call.1} parent=11 // pred_fallthru
          _
        // Predicated region
        $region17: #{tpu_custom_call.1} parent=11 // pred_check
          %p179 = pneg %p83
        $region18: #{tpu_custom_call.1} parent=11 // pred_check_branch
          %181 = sbr.rel (%p179) target = $region20
        $region19: #{tpu_custom_call.1} parent=11 // pred_region
          _
        $region20: #{tpu_custom_call.1} parent=11 // pred_fallthru
          _
        // Predicated region
        $region21: #{tpu_custom_call.1} parent=11 // pred_check
          %p182 = pneg %p104
        $region22: #{tpu_custom_call.1} parent=11 // pred_check_branch
          %184 = sbr.rel (%p182) target = $region24
        $region23: #{tpu_custom_call.1} parent=11 // pred_region
          _
        $region24: #{tpu_custom_call.1} parent=11 // pred_fallthru
          _
        // Predicated region
        $region25: #{tpu_custom_call.1} parent=11 // pred_check
          %p185 = pneg %p125
        $region26: #{tpu_custom_call.1} parent=11 // pred_check_branch
          %187 = sbr.rel (%p185) target = $region28
        $region27: #{tpu_custom_call.1} parent=11 // pred_region
          _
        $region28: #{tpu_custom_call.1} parent=11 // pred_fallthru
          _
      $region12: #{tpu_custom_call.1} parent=5 // pred_fallthru
        _
      %p188 = scmp.lt.s32.totalorder %s15, 2
      // Predicated region
      $region29: #{tpu_custom_call.1} parent=5 // pred_check
        %p189 = pneg %p188
      $region30: #{tpu_custom_call.1} parent=5 // pred_check_branch
        %191 = sbr.rel (%p189) target = $region32
      $region31: #{tpu_custom_call.1} parent=5 // pred_region
        // Predicated region
        $region33: #{tpu_custom_call.1} parent=31 // pred_check
          %p192 = pneg %p35
        $region34: #{tpu_custom_call.1} parent=31 // pred_check_branch
          %194 = sbr.rel (%p192) target = $region36
        $region35: #{tpu_custom_call.1} parent=31 // pred_region
          %s195 = sand.u32 %s25, 1
          %s196 = sand.u32 %s25, 1
          %s197 = smul.addr %s196, 80
          %s198 = scalar_lea.vmem [#allocation2], %s197
          %s199 = smul.addr %s15, 5
          %s200 = smul.addr %s199, 8
          %s201 = scalar_lea.vmem %s0, %s200
          // Predicated region
          $region37: #{tpu_custom_call.1} parent=35 // pred_check
            _
          $region38: #{tpu_custom_call.1} parent=35 // pred_check_branch
            %203 = sbr.rel (0) target = $region40
          $region39: #{tpu_custom_call.1} parent=35 // pred_region
            // Predicated region
            $region41: #{tpu_custom_call.1} parent=39 // pred_check
              _
            $region42: #{tpu_custom_call.1} parent=39 // pred_check_branch
              %205 = sbr.rel (0) target = $region44
            $region43: #{tpu_custom_call.1} parent=39 // pred_region
              // Predicated region
              $region56: #{tpu_custom_call.1} parent=43 // pred_check
                _
              $region57: #{tpu_custom_call.1} parent=43 // pred_check_branch
                %238 = sbr.rel (0) target = $region59
              $region58: #{tpu_custom_call.1} parent=43 // pred_region
                loop: start=0, step=1, limit=1
                $region60: #{tpu_custom_call.1} parent=58 // loop_pre_header
                  _
                $region61: #{tpu_custom_call.1} parent=58 // loop_header
                  %s240 = sphi 0, %s244
                  %p241 = scmp.ge.s32.totalorder %s240, 1
                  %s245 = sphi %s201, %s201
                  %s246 = sphi %s198, %s198
                $region62: #{tpu_custom_call.1} parent=58 // loop_header_branch
                  %243 = sbr.rel (%p241) target = $region66
                $region63: #{tpu_custom_call.1} parent=58 // loop_body
                  %v247 = vld [vmem:[%s245] sm:$0xff]
                  %248 = vst [vmem:[%s246] sm:$0xff] %v247
                  %v249 = vld [vmem:[%s245 + $0x8] sm:$0xff]
                  %250 = vst [vmem:[%s246 + $0x8] sm:$0xff] %v249
                  %v251 = vld [vmem:[%s245 + $0x10] sm:$0xff]
                  %252 = vst [vmem:[%s246 + $0x10] sm:$0xff] %v251
                  %v253 = vld [vmem:[%s245 + $0x18] sm:$0xff]
                  %254 = vst [vmem:[%s246 + $0x18] sm:$0xff] %v253
                  %v255 = vld [vmem:[%s245 + $0x20] sm:$0xff]
                  %256 = vst [vmem:[%s246 + $0x20] sm:$0xff] %v255
                  %v257 = vld [vmem:[%s245 + $0x50] sm:$0xff]
                  %258 = vst [vmem:[%s246 + $0x28] sm:$0xff] %v257
                  %v259 = vld [vmem:[%s245 + $0x58] sm:$0xff]
                  %260 = vst [vmem:[%s246 + $0x30] sm:$0xff] %v259
                  %v261 = vld [vmem:[%s245 + $0x60] sm:$0xff]
                  %262 = vst [vmem:[%s246 + $0x38] sm:$0xff] %v261
                  %v263 = vld [vmem:[%s245 + $0x68] sm:$0xff]
                  %264 = vst [vmem:[%s246 + $0x40] sm:$0xff] %v263
                  %v265 = vld [vmem:[%s245 + $0x70] sm:$0xff]
                  %266 = vst [vmem:[%s246 + $0x48] sm:$0xff] %v265
                $region64: #{tpu_custom_call.1} parent=58 // loop_footer
                  %s244 = sadd.s32 1, %s240
                $region65: #{tpu_custom_call.1} parent=58 // loop_footer_branch
                  %239 = sbr.rel target = $region61
                $region66: #{tpu_custom_call.1} parent=58 // loop_exit
                  _
              $region59: #{tpu_custom_call.1} parent=43 // pred_fallthru
                _
              // Predicated region
              $region67: #{tpu_custom_call.1} parent=43 // pred_check
                _
              $region68: #{tpu_custom_call.1} parent=43 // pred_check_branch
                %268 = sbr.rel target = $region70
              $region69: #{tpu_custom_call.1} parent=43 // pred_region
                _
              $region70: #{tpu_custom_call.1} parent=43 // pred_fallthru
                _
            $region44: #{tpu_custom_call.1} parent=39 // pred_fallthru
              _
            // Predicated region
            $region45: #{tpu_custom_call.1} parent=39 // pred_check
              _
            $region46: #{tpu_custom_call.1} parent=39 // pred_check_branch
              %207 = sbr.rel target = $region48
            $region47: #{tpu_custom_call.1} parent=39 // pred_region
              loop: start=0, step=1, limit=1
              $region49: #{tpu_custom_call.1} parent=47 // loop_pre_header
                _
              $region50: #{tpu_custom_call.1} parent=47 // loop_header
                %s210 = sphi 0, %s214
                %p211 = scmp.ge.s32.totalorder %s210, 1
                %s215 = sphi %s201, %s201
                %s216 = sphi %s198, %s198
              $region51: #{tpu_custom_call.1} parent=47 // loop_header_branch
                %213 = sbr.rel (%p211) target = $region55
              $region52: #{tpu_custom_call.1} parent=47 // loop_body
                %v217 = vld [vmem:[%s215] sm:$0xff]
                %218 = vst [vmem:[%s216] sm:$0xff] %v217
                %v219 = vld [vmem:[%s215 + $0x8] sm:$0xff]
                %220 = vst [vmem:[%s216 + $0x8] sm:$0xff] %v219
                %v221 = vld [vmem:[%s215 + $0x10] sm:$0xff]
                %222 = vst [vmem:[%s216 + $0x10] sm:$0xff] %v221
                %v223 = vld [vmem:[%s215 + $0x18] sm:$0xff]
                %224 = vst [vmem:[%s216 + $0x18] sm:$0xff] %v223
                %v225 = vld [vmem:[%s215 + $0x20] sm:$0xff]
                %226 = vst [vmem:[%s216 + $0x20] sm:$0xff] %v225
                %v227 = vld [vmem:[%s215 + $0x50] sm:$0xff]
                %228 = vst [vmem:[%s216 + $0x28] sm:$0xff] %v227
                %v229 = vld [vmem:[%s215 + $0x58] sm:$0xff]
                %230 = vst [vmem:[%s216 + $0x30] sm:$0xff] %v229
                %v231 = vld [vmem:[%s215 + $0x60] sm:$0xff]
                %232 = vst [vmem:[%s216 + $0x38] sm:$0xff] %v231
                %v233 = vld [vmem:[%s215 + $0x68] sm:$0xff]
                %234 = vst [vmem:[%s216 + $0x40] sm:$0xff] %v233
                %v235 = vld [vmem:[%s215 + $0x70] sm:$0xff]
                %236 = vst [vmem:[%s216 + $0x48] sm:$0xff] %v235
              $region53: #{tpu_custom_call.1} parent=47 // loop_footer
                %s214 = sadd.s32 1, %s210
              $region54: #{tpu_custom_call.1} parent=47 // loop_footer_branch
                %209 = sbr.rel target = $region50
              $region55: #{tpu_custom_call.1} parent=47 // loop_exit
                _
            $region48: #{tpu_custom_call.1} parent=39 // pred_fallthru
              _
          $region40: #{tpu_custom_call.1} parent=35 // pred_fallthru
            _
          %269 = vnop
        $region36: #{tpu_custom_call.1} parent=31 // pred_fallthru
          _
      $region32: #{tpu_custom_call.1} parent=5 // pred_fallthru
        _
      %p270 = scmp.le.s32.totalorder 1, %s15
      %p271 = scmp.lt.s32.totalorder %s15, 3
      %p272 = pnand %p270, %p271
      %p273 = pneg %p272
      // Predicated region
      $region71: #{tpu_custom_call.1} parent=5 // pred_check
        _
      $region72: #{tpu_custom_call.1} parent=5 // pred_check_branch
        %275 = sbr.rel (%p272) target = $region74
      $region73: #{tpu_custom_call.1} parent=5 // pred_region
        %s276 = ssub.s32 %s15, 1
        %s277 = sand.u32 %s28, 1
        %s278 = sand.u32 %s28, 1
        %s279 = smul.addr %s278, 80
        %s280 = scalar_lea.vmem [#allocation2], %s279
        // Predicated region
        $region75: #{tpu_custom_call.1} parent=73 // pred_check
          %p281 = pneg %p41
        $region76: #{tpu_custom_call.1} parent=73 // pred_check_branch
          %283 = sbr.rel (%p281) target = $region78
        $region77: #{tpu_custom_call.1} parent=73 // pred_region
          _
        $region78: #{tpu_custom_call.1} parent=73 // pred_fallthru
          _
        // Predicated region
        $region79: #{tpu_custom_call.1} parent=73 // pred_check
          %p284 = pneg %p62
        $region80: #{tpu_custom_call.1} parent=73 // pred_check_branch
          %286 = sbr.rel (%p284) target = $region82
        $region81: #{tpu_custom_call.1} parent=73 // pred_region
          %287 = dma.done [#allocation4], 6144
        $region82: #{tpu_custom_call.1} parent=73 // pred_fallthru
          _
        %s288 = sand.u32 %s28, 1
        %s289 = sand.u32 %s28, 1
        %s290 = smul.addr %s289, 80
        %s291 = scalar_lea.vmem [#allocation2], %s290
        %p292 = pneg %p41
        %p293 = pneg %p38
        %p294 = pneg %p62
        %p295 = pneg %p59
        %p296 = pneg %p83
        %p297 = pneg %p80
        %p298 = pneg %p104
        %p299 = pneg %p101
        %p300 = pneg %p125
        %p301 = pneg %p122
        %p302 = pneg %p151
        %p303 = pneg %p148
        %s304 = sand.u32 %s138, 1
        %s305 = scalar_lea.sflag [#allocation5], %s304
        %s306 = sand.u32 %s138, 1
        %s307 = smul.addr %s306, 64
        %s308 = scalar_lea.vmem [#allocation6], %s307
        %s309 = smul.u32 4, %s20
        %v310 = vld [vmem:[%s280] sm:$0xff]
        %v311 = vld [vmem:[%s280 + $0x8] sm:$0xff]
        %v312 = vld [vmem:[%s280 + $0x10] sm:$0xff]
        %v313 = vld [vmem:[%s280 + $0x18] sm:$0xff]
        %v314 = vld [vmem:[%s280 + $0x20] sm:$0x3]
        %v315 = vld [vmem:[%s280 + $0x28] sm:$0xff]
        %v316 = vld [vmem:[%s280 + $0x30] sm:$0xff]
        %v317 = vld [vmem:[%s280 + $0x38] sm:$0xff]
        %v318 = vld [vmem:[%s280 + $0x40] sm:$0xff]
        %v319 = vld [vmem:[%s280 + $0x48] sm:$0x3]
        %vm330 = vcmask 1046528
        %v331 = vrot.slane %v310, 1
        %v332 = vrot.slane %v311, 1
        %v333 = vsel %vm330, %v331, %v332
        %v334 = vrot.slane %v312, 1
        %v335 = vsel %vm330, %v332, %v334
        %v336 = vrot.slane %v313, 1
        %v337 = vsel %vm330, %v334, %v336
        %v338 = vrot.slane %v314, 1
        %v339 = vsel %vm330, %v336, %v338
        %v340 = vrot.slane %v315, 1
        %v341 = vrot.slane %v316, 1
        %v342 = vsel %vm330, %v340, %v341
        %v343 = vrot.slane %v317, 1
        %v344 = vsel %vm330, %v341, %v343
        %v345 = vrot.slane %v318, 1
        %v346 = vsel %vm330, %v343, %v345
        %v347 = vrot.slane %v319, 1
        %v348 = vsel %vm330, %v345, %v347
        %vm357 = vcmp.gt.f32.partialorder %v310, 0.0
        %vm358 = vcmp.gt.f32.partialorder %v311, 0.0
        %vm359 = vcmp.gt.f32.partialorder %v312, 0.0
        %vm360 = vcmp.gt.f32.partialorder %v313, 0.0
        %vm361 = vcmp.gt.f32.partialorder %v314, 0.0
        %vm362 = vcmp.gt.f32.partialorder %v315, 0.0
        %vm363 = vcmp.gt.f32.partialorder %v316, 0.0
        %vm364 = vcmp.gt.f32.partialorder %v317, 0.0
        %vm365 = vcmp.gt.f32.partialorder %v318, 0.0
        %vm366 = vcmp.gt.f32.partialorder %v319, 0.0
        %v367 = vmul.f32 %v310, 0.2
        %v368 = vmul.f32 %v311, 0.2
        %v369 = vmul.f32 %v312, 0.2
        %v370 = vmul.f32 %v313, 0.2
        %v371 = vmul.f32 %v314, 0.2
        %v372 = vmul.f32 %v315, 0.2
        %v373 = vmul.f32 %v316, 0.2
        %v374 = vmul.f32 %v317, 0.2
        %v375 = vmul.f32 %v318, 0.2
        %v376 = vmul.f32 %v319, 0.2
        %v377 = vsel %vm357, %v310, %v367
        %v378 = vsel %vm358, %v311, %v368
        %v379 = vsel %vm359, %v312, %v369
        %v380 = vsel %vm360, %v313, %v370
        %v381 = vsel %vm361, %v314, %v371
        %v382 = vsel %vm362, %v315, %v372
        %v383 = vsel %vm363, %v316, %v373
        %v384 = vsel %vm364, %v317, %v374
        %v385 = vsel %vm365, %v318, %v375
        %v386 = vsel %vm366, %v319, %v376
        %v397 = vrot.slane %v377, 1
        %v398 = vrot.slane %v378, 1
        %v399 = vsel %vm330, %v397, %v398
        %v400 = vrot.slane %v379, 1
        %v401 = vsel %vm330, %v398, %v400
        %v402 = vrot.slane %v380, 1
        %v403 = vsel %vm330, %v400, %v402
        %v404 = vrot.slane %v381, 1
        %v405 = vsel %vm330, %v402, %v404
        %v406 = vrot.slane %v382, 1
        %v407 = vrot.slane %v383, 1
        %v408 = vsel %vm330, %v406, %v407
        %v409 = vrot.slane %v384, 1
        %v410 = vsel %vm330, %v407, %v409
        %v411 = vrot.slane %v385, 1
        %v412 = vsel %vm330, %v409, %v411
        %v413 = vrot.slane %v386, 1
        %v414 = vsel %vm330, %v411, %v413
        %vm423 = vcmask 1045504
        %v424 = vrot.slane %v377, 2
        %v425 = vrot.slane %v378, 2
        %v426 = vsel %vm423, %v424, %v425
        %v427 = vrot.slane %v379, 2
        %v428 = vsel %vm423, %v425, %v427
        %v429 = vrot.slane %v380, 2
        %v430 = vsel %vm423, %v427, %v429
        %v431 = vrot.slane %v381, 2
        %v432 = vsel %vm423, %v429, %v431
        %v433 = vrot.slane %v382, 2
        %v434 = vrot.slane %v383, 2
        %v435 = vsel %vm423, %v433, %v434
        %v436 = vrot.slane %v384, 2
        %v437 = vsel %vm423, %v434, %v436
        %v438 = vrot.slane %v385, 2
        %v439 = vsel %vm423, %v436, %v438
        %v440 = vrot.slane %v386, 2
        %v441 = vsel %vm423, %v438, %v440
        %v450 = vld [vmem:[#allocation3] sm:$0xff]
        %v451 = vld [vmem:[#allocation3 + $0x8] sm:$0xff]
        %v452 = vld [vmem:[#allocation3 + $0x10] sm:$0xff]
        %v453 = vld [vmem:[#allocation3 + $0x18] sm:$0xff]
        %v454 = vld [vmem:[#allocation3 + $0x20] sm:$0xff]
        %v455 = vld [vmem:[#allocation3 + $0x28] sm:$0xff]
        %v456 = vld [vmem:[#allocation3 + $0x30] sm:$0xff]
        %v457 = vld [vmem:[#allocation3 + $0x38] sm:$0xff]
        %v458 = vld [vmem:[#allocation3 + $0x40] sm:$0xff]
        %v459 = vld [vmem:[#allocation3 + $0x48] sm:$0xff]
        %v460 = vld [vmem:[#allocation3 + $0x50] sm:$0xff]
        %v461 = vld [vmem:[#allocation3 + $0x58] sm:$0xff]
        %v462 = vld [vmem:[#allocation3 + $0x60] sm:$0xff]
        %v463 = vld [vmem:[#allocation3 + $0x68] sm:$0xff]
        %v464 = vld [vmem:[#allocation3 + $0x70] sm:$0xff]
        %v465 = vld [vmem:[#allocation3 + $0x78] sm:$0xff]
        %v466 = vld [vmem:[#allocation3 + $0x80] sm:$0xff]
        %v467 = vld [vmem:[#allocation3 + $0x88] sm:$0xff]
        %v468 = vld [vmem:[#allocation3 + $0x90] sm:$0xff]
        %v469 = vld [vmem:[#allocation3 + $0x98] sm:$0xff]
        %v470 = vld [vmem:[#allocation3 + $0xa0] sm:$0xff]
        %v471 = vld [vmem:[#allocation3 + $0xa8] sm:$0xff]
        %v472 = vld [vmem:[#allocation3 + $0xb0] sm:$0xff]
        %v473 = vld [vmem:[#allocation3 + $0xb8] sm:$0xff]
        %v474 = vld [vmem:[#allocation3 + $0xc0] sm:$0xff]
        %v475 = vld [vmem:[#allocation3 + $0xc8] sm:$0xff]
        %v476 = vld [vmem:[#allocation3 + $0xd0] sm:$0xff]
        %v477 = vld [vmem:[#allocation3 + $0xd8] sm:$0xff]
        %v478 = vld [vmem:[#allocation3 + $0xe0] sm:$0xff]
        %v479 = vld [vmem:[#allocation3 + $0xe8] sm:$0xff]
        %v480 = vld [vmem:[#allocation3 + $0xf0] sm:$0xff]
        %v481 = vld [vmem:[#allocation3 + $0xf8] sm:$0xff]
        %v482 = vld [vmem:[#allocation3 + $0x100] sm:$0xff]
        %v483 = vld [vmem:[#allocation3 + $0x108] sm:$0xff]
        %v484 = vld [vmem:[#allocation3 + $0x110] sm:$0xff]
        %v485 = vld [vmem:[#allocation3 + $0x118] sm:$0xff]
        %v486 = vld [vmem:[#allocation3 + $0x120] sm:$0xff]
        %v487 = vld [vmem:[#allocation3 + $0x128] sm:$0xff]
        %v488 = vld [vmem:[#allocation3 + $0x130] sm:$0xff]
        %v489 = vld [vmem:[#allocation3 + $0x138] sm:$0xff]
        %v490 = vld [vmem:[#allocation3 + $0x140] sm:$0xff]
        %v491 = vld [vmem:[#allocation3 + $0x148] sm:$0xff]
        %v492 = vld [vmem:[#allocation3 + $0x150] sm:$0xff]
        %v493 = vld [vmem:[#allocation3 + $0x158] sm:$0xff]
        %v494 = vld [vmem:[#allocation3 + $0x160] sm:$0xff]
        %v495 = vld [vmem:[#allocation3 + $0x168] sm:$0xff]
        %v496 = vld [vmem:[#allocation3 + $0x170] sm:$0xff]
        %v497 = vld [vmem:[#allocation3 + $0x178] sm:$0xff]
        %v498 = vld [vmem:[%s2] sm:$0x1]
        %v500 = vlaneseq
        %v501 = vshrl.u32 %v500, 7
        %v502 = vsub.s32 0, %v501
        %v503 = vrot.slane %v498, %v502
        %505 = vmatprep.subr.mxu0 0.0
        %506 = vmatpush1.msra.mxu0 %v450
        %507 = vmatprep.subr.mxu0 0.0
        %508 = vmatpush1.msra.mxu0 %v451
        %509 = vmatprep.subr.mxu0 0.0
        %510 = vmatpush1.msra.mxu0 %v452
        %511 = vmatprep.subr.mxu0 0.0
        %512 = vmatpush1.msra.mxu0 %v453
        %513 = vmatprep.subr.mxu0 0.0
        %514 = vmatpush1.msra.mxu0 %v454
        %515 = vmatprep.subr.mxu0 0.0
        %516 = vmatpush1.msra.mxu0 %v455
        %517 = vmatprep.subr.mxu0 0.0
        %518 = vmatpush1.msra.mxu0 %v456
        %519 = vmatprep.subr.mxu0 0.0
        %520 = vmatpush1.msra.mxu0 %v457
        %521 = vmatprep.subr.mxu0 0.0
        %522 = vmatpush1.msra.mxu0 %v458
        %523 = vmatprep.subr.mxu0 0.0
        %524 = vmatpush1.msra.mxu0 %v459
        %525 = vmatprep.subr.mxu0 0.0
        %526 = vmatpush1.msra.mxu0 %v460
        %527 = vmatprep.subr.mxu0 0.0
        %528 = vmatpush1.msra.mxu0 %v461
        %529 = vmatprep.subr.mxu0 0.0
        %530 = vmatpush1.msra.mxu0 %v462
        %531 = vmatprep.subr.mxu0 0.0
        %532 = vmatpush1.msra.mxu0 %v463
        %533 = vmatprep.subr.mxu0 0.0
        %534 = vmatpush1.msra.mxu0 %v464
        %535 = vmatprep.subr.mxu0 0.0
        %536 = vmatpush1.msra.mxu0 %v465
        %537 = vmatprep.subr.mxu0 0.0
        %538 = vmatpush1.msra.mxu0 %v466
        %539 = vmatprep.subr.mxu0 0.0
        %540 = vmatpush1.msra.mxu0 %v467
        %541 = vmatprep.subr.mxu0 0.0
        %542 = vmatpush1.msra.mxu0 %v468
        %543 = vmatprep.subr.mxu0 0.0
        %544 = vmatpush1.msra.mxu0 %v469
        %545 = vmatprep.subr.mxu0 0.0
        %546 = vmatpush1.msra.mxu0 %v470
        %547 = vmatprep.subr.mxu0 0.0
        %548 = vmatpush1.msra.mxu0 %v471
        %549 = vmatprep.subr.mxu0 0.0
        %550 = vmatpush1.msra.mxu0 %v472
        %551 = vmatprep.subr.mxu0 0.0
        %552 = vmatpush1.msra.mxu0 %v473
        %553 = vmatprep.subr.mxu0 0.0
        %554 = vmatpush1.msra.mxu0 %v474
        %555 = vmatprep.subr.mxu0 0.0
        %556 = vmatpush1.msra.mxu0 %v475
        %557 = vmatprep.subr.mxu0 0.0
        %558 = vmatpush1.msra.mxu0 %v476
        %559 = vmatprep.subr.mxu0 0.0
        %560 = vmatpush1.msra.mxu0 %v477
        %561 = vmatprep.subr.mxu0 0.0
        %562 = vmatpush1.msra.mxu0 %v478
        %563 = vmatprep.subr.mxu0 0.0
        %564 = vmatpush1.msra.mxu0 %v479
        %565 = vmatprep.subr.mxu0 0.0
        %566 = vmatpush1.msra.mxu0 %v480
        %567 = vmatprep.subr.mxu0 0.0
        %568 = vmatpush1.msra.mxu0 %v481
        %569 = vmatprep.mubr.f32.mxu0 %v399
        %570 = vmatmul.mubr.f32.gmra.mrb[0].mxu0 %v377
        %v571 = vpop.f32.mrb[0].mxu0
        %v572 = vadd.f32 %v503, %v571
        %v573 = vpop.f32.mrb[0].mxu0
        %574 = vmatprep.mubr.f32.mxu0 %v401
        %575 = vmatmul.mubr.f32.gmra.mrb[0].mxu0 %v378
        %v576 = vpop.f32.mrb[0].mxu0
        %v577 = vadd.f32 %v503, %v576
        %v578 = vpop.f32.mrb[0].mxu0
        %579 = vmatprep.mubr.f32.mxu0 %v403
        %580 = vmatmul.mubr.f32.gmra.mrb[0].mxu0 %v379
        %v581 = vpop.f32.mrb[0].mxu0
        %v582 = vadd.f32 %v503, %v581
        %v583 = vpop.f32.mrb[0].mxu0
        %584 = vmatprep.mubr.f32.mxu0 %v405
        %585 = vmatmul.mubr.f32.gmra.mrb[0].mxu0 %v380
        %v586 = vpop.f32.mrb[0].mxu0
        %v587 = vadd.f32 %v503, %v586
        %v588 = vpop.f32.mrb[0].mxu0
        %589 = vmatprep.mubr.f32.mxu0 %v408
        %590 = vmatmul.mubr.f32.gmra.mrb[0].mxu0 %v382
        %v591 = vpop.f32.mrb[0].mxu0
        %v592 = vadd.f32 %v503, %v591
        %v593 = vpop.f32.mrb[0].mxu0
        %594 = vmatprep.mubr.f32.mxu0 %v410
        %595 = vmatmul.mubr.f32.gmra.mrb[0].mxu0 %v383
        %v596 = vpop.f32.mrb[0].mxu0
        %v597 = vadd.f32 %v503, %v596
        %v598 = vpop.f32.mrb[0].mxu0
        %599 = vmatprep.mubr.f32.mxu0 %v412
        %600 = vmatmul.mubr.f32.gmra.mrb[0].mxu0 %v384
        %v601 = vpop.f32.mrb[0].mxu0
        %v602 = vadd.f32 %v503, %v601
        %v603 = vpop.f32.mrb[0].mxu0
        %604 = vmatprep.mubr.f32.mxu0 %v414
        %605 = vmatmul.mubr.f32.gmra.mrb[0].mxu0 %v385
        %v606 = vpop.f32.mrb[0].mxu0
        %v607 = vadd.f32 %v503, %v606
        %v608 = vpop.f32.mrb[0].mxu0
        %609 = vdwg.mxu0
        %610 = vmatprep.subr.mxu0 0.0
        %611 = vmatpush1.msra.mxu0 %v482
        %612 = vmatprep.subr.mxu0 0.0
        %613 = vmatpush1.msra.mxu0 %v483
        %614 = vmatprep.subr.mxu0 0.0
        %615 = vmatpush1.msra.mxu0 %v484
        %616 = vmatprep.subr.mxu0 0.0
        %617 = vmatpush1.msra.mxu0 %v485
        %618 = vmatprep.subr.mxu0 0.0
        %619 = vmatpush1.msra.mxu0 %v486
        %620 = vmatprep.subr.mxu0 0.0
        %621 = vmatpush1.msra.mxu0 %v487
        %622 = vmatprep.subr.mxu0 0.0
        %623 = vmatpush1.msra.mxu0 %v488
        %624 = vmatprep.subr.mxu0 0.0
        %625 = vmatpush1.msra.mxu0 %v489
        %626 = vmatprep.subr.mxu0 0.0
        %627 = vmatpush1.msra.mxu0 %v490
        %628 = vmatprep.subr.mxu0 0.0
        %629 = vmatpush1.msra.mxu0 %v491
        %630 = vmatprep.subr.mxu0 0.0
        %631 = vmatpush1.msra.mxu0 %v492
        %632 = vmatprep.subr.mxu0 0.0
        %633 = vmatpush1.msra.mxu0 %v493
        %634 = vmatprep.subr.mxu0 0.0
        %635 = vmatpush1.msra.mxu0 %v494
        %636 = vmatprep.subr.mxu0 0.0
        %637 = vmatpush1.msra.mxu0 %v495
        %638 = vmatprep.subr.mxu0 0.0
        %639 = vmatpush1.msra.mxu0 %v496
        %640 = vmatprep.subr.mxu0 0.0
        %641 = vmatpush1.msra.mxu0 %v497
        %642 = vmatprep.subr.mxu0 0.0
        %643 = vmatpush1.msra.mxu0 0.0
        %644 = vmatprep.subr.mxu0 0.0
        %645 = vmatpush1.msra.mxu0 0.0
        %646 = vmatprep.subr.mxu0 0.0
        %647 = vmatpush1.msra.mxu0 0.0
        %648 = vmatprep.subr.mxu0 0.0
        %649 = vmatpush1.msra.mxu0 0.0
        %650 = vmatprep.subr.mxu0 0.0
        %651 = vmatpush1.msra.mxu0 0.0
        %652 = vmatprep.subr.mxu0 0.0
        %653 = vmatpush1.msra.mxu0 0.0
        %654 = vmatprep.subr.mxu0 0.0
        %655 = vmatpush1.msra.mxu0 0.0
        %656 = vmatprep.subr.mxu0 0.0
        %657 = vmatpush1.msra.mxu0 0.0
        %658 = vmatprep.subr.mxu0 0.0
        %659 = vmatpush1.msra.mxu0 0.0
        %660 = vmatprep.subr.mxu0 0.0
        %661 = vmatpush1.msra.mxu0 0.0
        %662 = vmatprep.subr.mxu0 0.0
        %663 = vmatpush1.msra.mxu0 0.0
        %664 = vmatprep.subr.mxu0 0.0
        %665 = vmatpush1.msra.mxu0 0.0
        %666 = vmatprep.subr.mxu0 0.0
        %667 = vmatpush1.msra.mxu0 0.0
        %668 = vmatprep.subr.mxu0 0.0
        %669 = vmatpush1.msra.mxu0 0.0
        %670 = vmatprep.subr.mxu0 0.0
        %671 = vmatpush1.msra.mxu0 0.0
        %672 = vmatprep.subr.mxu0 0.0
        %673 = vmatpush1.msra.mxu0 0.0
        %674 = vmatprep.mubr.f32.mxu0 0.0
        %675 = vmatmul.mubr.f32.gmra.mrb[0].mxu0 %v426
        %v676 = vpop.f32.mrb[0].mxu0
        %v677 = vadd.f32 %v572, %v676
        %v678 = vpop.f32.mrb[0].mxu0
        %679 = vmatprep.mubr.f32.mxu0 0.0
        %680 = vmatmul.mubr.f32.gmra.mrb[0].mxu0 %v428
        %v681 = vpop.f32.mrb[0].mxu0
        %v682 = vadd.f32 %v577, %v681
        %v683 = vpop.f32.mrb[0].mxu0
        %684 = vmatprep.mubr.f32.mxu0 0.0
        %685 = vmatmul.mubr.f32.gmra.mrb[0].mxu0 %v430
        %v686 = vpop.f32.mrb[0].mxu0
        %v687 = vadd.f32 %v582, %v686
        %v688 = vpop.f32.mrb[0].mxu0
        %689 = vmatprep.mubr.f32.mxu0 0.0
        %690 = vmatmul.mubr.f32.gmra.mrb[0].mxu0 %v432
        %v691 = vpop.f32.mrb[0].mxu0
        %v692 = vadd.f32 %v587, %v691
        %v693 = vpop.f32.mrb[0].mxu0
        %694 = vmatprep.mubr.f32.mxu0 0.0
        %695 = vmatmul.mubr.f32.gmra.mrb[0].mxu0 %v435
        %v696 = vpop.f32.mrb[0].mxu0
        %v697 = vadd.f32 %v592, %v696
        %v698 = vpop.f32.mrb[0].mxu0
        %699 = vmatprep.mubr.f32.mxu0 0.0
        %700 = vmatmul.mubr.f32.gmra.mrb[0].mxu0 %v437
        %v701 = vpop.f32.mrb[0].mxu0
        %v702 = vadd.f32 %v597, %v701
        %v703 = vpop.f32.mrb[0].mxu0
        %704 = vmatprep.mubr.f32.mxu0 0.0
        %705 = vmatmul.mubr.f32.gmra.mrb[0].mxu0 %v439
        %v706 = vpop.f32.mrb[0].mxu0
        %v707 = vadd.f32 %v602, %v706
        %v708 = vpop.f32.mrb[0].mxu0
        %709 = vmatprep.mubr.f32.mxu0 0.0
        %710 = vmatmul.mubr.f32.gmra.mrb[0].mxu0 %v441
        %v711 = vpop.f32.mrb[0].mxu0
        %v712 = vadd.f32 %v607, %v711
        %v713 = vpop.f32.mrb[0].mxu0
        %714 = vdwg.mxu0
        %vm715 = vcmp.gt.f32.partialorder %v677, 0.0
        %vm716 = vcmp.gt.f32.partialorder %v682, 0.0
        %vm717 = vcmp.gt.f32.partialorder %v687, 0.0
        %vm718 = vcmp.gt.f32.partialorder %v692, 0.0
        %vm719 = vcmp.gt.f32.partialorder %v697, 0.0
        %vm720 = vcmp.gt.f32.partialorder %v702, 0.0
        %vm721 = vcmp.gt.f32.partialorder %v707, 0.0
        %vm722 = vcmp.gt.f32.partialorder %v712, 0.0
        %v723 = vmul.f32 %v677, 0.2
        %v724 = vmul.f32 %v682, 0.2
        %v725 = vmul.f32 %v687, 0.2
        %v726 = vmul.f32 %v692, 0.2
        %v727 = vmul.f32 %v697, 0.2
        %v728 = vmul.f32 %v702, 0.2
        %v729 = vmul.f32 %v707, 0.2
        %v730 = vmul.f32 %v712, 0.2
        %v731 = vsel %vm715, %v677, %v723
        %v732 = vsel %vm716, %v682, %v724
        %v733 = vsel %vm717, %v687, %v725
        %v734 = vsel %vm718, %v692, %v726
        %v735 = vsel %vm719, %v697, %v727
        %v736 = vsel %vm720, %v702, %v728
        %v737 = vsel %vm721, %v707, %v729
        %v738 = vsel %vm722, %v712, %v730
        %v739 = vld [vmem:[%s3] sm:$0xff]
        %v740 = vld [vmem:[%s3 + $0x8] sm:$0xff]
        %v741 = vld [vmem:[%s3 + $0x10] sm:$0xff]
        %v742 = vld [vmem:[%s3 + $0x18] sm:$0xff]
        %v743 = vld [vmem:[%s3 + $0x20] sm:$0xff]
        %v744 = vld [vmem:[%s3 + $0x28] sm:$0xff]
        %v745 = vld [vmem:[%s3 + $0x30] sm:$0xff]
        %v746 = vld [vmem:[%s3 + $0x38] sm:$0xff]
        %v747 = vld [vmem:[%s3 + $0x40] sm:$0xff]
        %v748 = vld [vmem:[%s3 + $0x48] sm:$0xff]
        %v749 = vld [vmem:[%s3 + $0x50] sm:$0xff]
        %v750 = vld [vmem:[%s3 + $0x58] sm:$0xff]
        %v751 = vld [vmem:[%s3 + $0x60] sm:$0xff]
        %v752 = vld [vmem:[%s3 + $0x68] sm:$0xff]
        %v753 = vld [vmem:[%s3 + $0x70] sm:$0xff]
        %v754 = vld [vmem:[%s3 + $0x78] sm:$0xff]
        %v755 = vld [vmem:[%s3 + $0x80] sm:$0xff]
        %v756 = vld [vmem:[%s3 + $0x88] sm:$0xff]
        %v757 = vld [vmem:[%s3 + $0x90] sm:$0xff]
        %v758 = vld [vmem:[%s3 + $0x98] sm:$0xff]
        %v759 = vld [vmem:[%s3 + $0xa0] sm:$0xff]
        %v760 = vld [vmem:[%s3 + $0xa8] sm:$0xff]
        %v761 = vld [vmem:[%s3 + $0xb0] sm:$0xff]
        %v762 = vld [vmem:[%s3 + $0xb8] sm:$0xff]
        %v763 = vld [vmem:[%s3 + $0xc0] sm:$0xff]
        %v764 = vld [vmem:[%s3 + $0xc8] sm:$0xff]
        %v765 = vld [vmem:[%s3 + $0xd0] sm:$0xff]
        %v766 = vld [vmem:[%s3 + $0xd8] sm:$0xff]
        %v767 = vld [vmem:[%s3 + $0xe0] sm:$0xff]
        %v768 = vld [vmem:[%s3 + $0xe8] sm:$0xff]
        %v769 = vld [vmem:[%s3 + $0xf0] sm:$0xff]
        %v770 = vld [vmem:[%s3 + $0xf8] sm:$0xff]
        %v771 = vld [vmem:[%s4] sm:$0x1]
        %v773 = vlaneseq
        %v774 = vshrl.u32 %v773, 7
        %v775 = vsub.s32 0, %v774
        %v776 = vrot.slane %v771, %v775
        %778 = vmatprep.subr.mxu0 0.0
        %779 = vmatpush1.msra.mxu0 %v739
        %780 = vmatprep.subr.mxu0 0.0
        %781 = vmatpush1.msra.mxu0 %v740
        %782 = vmatprep.subr.mxu0 0.0
        %783 = vmatpush1.msra.mxu0 %v741
        %784 = vmatprep.subr.mxu0 0.0
        %785 = vmatpush1.msra.mxu0 %v742
        %786 = vmatprep.subr.mxu0 0.0
        %787 = vmatpush1.msra.mxu0 %v743
        %788 = vmatprep.subr.mxu0 0.0
        %789 = vmatpush1.msra.mxu0 %v744
        %790 = vmatprep.subr.mxu0 0.0
        %791 = vmatpush1.msra.mxu0 %v745
        %792 = vmatprep.subr.mxu0 0.0
        %793 = vmatpush1.msra.mxu0 %v746
        %794 = vmatprep.subr.mxu0 0.0
        %795 = vmatpush1.msra.mxu0 %v747
        %796 = vmatprep.subr.mxu0 0.0
        %797 = vmatpush1.msra.mxu0 %v748
        %798 = vmatprep.subr.mxu0 0.0
        %799 = vmatpush1.msra.mxu0 %v749
        %800 = vmatprep.subr.mxu0 0.0
        %801 = vmatpush1.msra.mxu0 %v750
        %802 = vmatprep.subr.mxu0 0.0
        %803 = vmatpush1.msra.mxu0 %v751
        %804 = vmatprep.subr.mxu0 0.0
        %805 = vmatpush1.msra.mxu0 %v752
        %806 = vmatprep.subr.mxu0 0.0
        %807 = vmatpush1.msra.mxu0 %v753
        %808 = vmatprep.subr.mxu0 0.0
        %809 = vmatpush1.msra.mxu0 %v754
        %810 = vmatprep.subr.mxu0 0.0
        %811 = vmatpush1.msra.mxu0 %v755
        %812 = vmatprep.subr.mxu0 0.0
        %813 = vmatpush1.msra.mxu0 %v756
        %814 = vmatprep.subr.mxu0 0.0
        %815 = vmatpush1.msra.mxu0 %v757
        %816 = vmatprep.subr.mxu0 0.0
        %817 = vmatpush1.msra.mxu0 %v758
        %818 = vmatprep.subr.mxu0 0.0
        %819 = vmatpush1.msra.mxu0 %v759
        %820 = vmatprep.subr.mxu0 0.0
        %821 = vmatpush1.msra.mxu0 %v760
        %822 = vmatprep.subr.mxu0 0.0
        %823 = vmatpush1.msra.mxu0 %v761
        %824 = vmatprep.subr.mxu0 0.0
        %825 = vmatpush1.msra.mxu0 %v762
        %826 = vmatprep.subr.mxu0 0.0
        %827 = vmatpush1.msra.mxu0 %v763
        %828 = vmatprep.subr.mxu0 0.0
        %829 = vmatpush1.msra.mxu0 %v764
        %830 = vmatprep.subr.mxu0 0.0
        %831 = vmatpush1.msra.mxu0 %v765
        %832 = vmatprep.subr.mxu0 0.0
        %833 = vmatpush1.msra.mxu0 %v766
        %834 = vmatprep.subr.mxu0 0.0
        %835 = vmatpush1.msra.mxu0 %v767
        %836 = vmatprep.subr.mxu0 0.0
        %837 = vmatpush1.msra.mxu0 %v768
        %838 = vmatprep.subr.mxu0 0.0
        %839 = vmatpush1.msra.mxu0 %v769
        %840 = vmatprep.subr.mxu0 0.0
        %841 = vmatpush1.msra.mxu0 %v770
        %842 = vmatprep.mubr.f32.mxu0 %v333
        %843 = vmatmul.mubr.f32.gmra.mrb[0].mxu0 %v731
        %v844 = vpop.f32.mrb[0].mxu0
        %v845 = vadd.f32 %v776, %v844
        %v846 = vpop.f32.mrb[0].mxu0
        %847 = vmatprep.mubr.f32.mxu0 %v335
        %848 = vmatmul.mubr.f32.gmra.mrb[0].mxu0 %v732
        %v849 = vpop.f32.mrb[0].mxu0
        %v850 = vadd.f32 %v776, %v849
        %v851 = vpop.f32.mrb[0].mxu0
        %852 = vmatprep.mubr.f32.mxu0 %v337
        %853 = vmatmul.mubr.f32.gmra.mrb[0].mxu0 %v733
        %v854 = vpop.f32.mrb[0].mxu0
        %v855 = vadd.f32 %v776, %v854
        %v856 = vpop.f32.mrb[0].mxu0
        %857 = vmatprep.mubr.f32.mxu0 %v339
        %858 = vmatmul.mubr.f32.gmra.mrb[0].mxu0 %v734
        %v859 = vpop.f32.mrb[0].mxu0
        %v860 = vadd.f32 %v776, %v859
        %v861 = vpop.f32.mrb[0].mxu0
        %862 = vmatprep.mubr.f32.mxu0 %v342
        %863 = vmatmul.mubr.f32.gmra.mrb[0].mxu0 %v735
        %v864 = vpop.f32.mrb[0].mxu0
        %v865 = vadd.f32 %v776, %v864
        %v866 = vpop.f32.mrb[0].mxu0
        %867 = vmatprep.mubr.f32.mxu0 %v344
        %868 = vmatmul.mubr.f32.gmra.mrb[0].mxu0 %v736
        %v869 = vpop.f32.mrb[0].mxu0
        %v870 = vadd.f32 %v776, %v869
        %v871 = vpop.f32.mrb[0].mxu0
        %872 = vmatprep.mubr.f32.mxu0 %v346
        %873 = vmatmul.mubr.f32.gmra.mrb[0].mxu0 %v737
        %v874 = vpop.f32.mrb[0].mxu0
        %v875 = vadd.f32 %v776, %v874
        %v876 = vpop.f32.mrb[0].mxu0
        %877 = vmatprep.mubr.f32.mxu0 %v348
        %878 = vmatmul.mubr.f32.gmra.mrb[0].mxu0 %v738
        %v879 = vpop.f32.mrb[0].mxu0
        %v880 = vadd.f32 %v776, %v879
        %v881 = vpop.f32.mrb[0].mxu0
        %882 = vdwg.mxu0
        %883 = vst [vmem:[%s308] sm:$0xff] %v845
        %884 = vst [vmem:[%s308 + $0x8] sm:$0xff] %v850
        %885 = vst [vmem:[%s308 + $0x10] sm:$0xff] %v855
        %886 = vst [vmem:[%s308 + $0x18] sm:$0xff] %v860
        %887 = vst [vmem:[%s308 + $0x20] sm:$0xff] %v865
        %888 = vst [vmem:[%s308 + $0x28] sm:$0xff] %v870
        %889 = vst [vmem:[%s308 + $0x30] sm:$0xff] %v875
        %890 = vst [vmem:[%s308 + $0x38] sm:$0xff] %v880
        %s891 = sand.u32 %s138, 1
        %s892 = scalar_lea.sflag [#allocation5], %s891
        %s893 = sand.u32 %s138, 1
        %s894 = smul.addr %s893, 64
        %s895 = scalar_lea.vmem [#allocation6], %s894
        // Predicated region
        $region83: #{tpu_custom_call.1} parent=73 // pred_check
          %p896 = pneg %p148
        $region84: #{tpu_custom_call.1} parent=73 // pred_check_branch
          %898 = sbr.rel (%p896) target = $region86
        $region85: #{tpu_custom_call.1} parent=73 // pred_region
          #allocation8 [shape = 'u32[6]{0}', space=smem, size = 0x18, scoped, tag = 'DMA stride descriptor']
          %s899 = smul.u32 4, %s20
          %s901 = ssub.s32 1024, 1024
          %902 = vsyncadd %s892, %s901
          %s903 = smul.addr %s899, 128
          %s904 = scalar_lea.hbm %s5, %s903
          %s906 = sshll.u32 1, 14
          %s907 = sxor.u32 4294967295, %s906
          %s910 = sshll.u32 7, 18
          %s911 = sxor.u32 4294967295, %s910
          %s912 = sand.u32 0, %s911
          %s914 = sor.u32 %s912, 0
          %s916 = sshll.u32 3, 24
          %s917 = sxor.u32 4294967295, %s916
          %s918 = sand.u32 %s914, %s917
          %s920 = sor.u32 %s918, 0
          %s921 = sshll.u32 %s895, 4
          %s922 = int_to_ptr.vmem [resolvable:$true] %s921
          %928 = sst [smem:[#allocation8]] 512
          %s929 = scalar_lea.smem [#allocation8], 1
          %930 = sst [smem:[%s929]] 1024
          %s931 = scalar_lea.smem [#allocation8], 2
          %932 = sst [smem:[%s931]] 4
          %s933 = scalar_lea.smem [#allocation8], 3
          %934 = sst [smem:[%s933]] 128
          %s935 = scalar_lea.smem [#allocation8], 4
          %936 = sst [smem:[%s935]] 128
          %s937 = scalar_lea.smem [#allocation8], 5
          %938 = sst [smem:[%s937]] 8
          %940 = dma.general %s922, 1024, %s904, %s892, [#allocation7], [#allocation8], %s920, 0
        $region86: #{tpu_custom_call.1} parent=73 // pred_fallthru
          _
      $region74: #{tpu_custom_call.1} parent=5 // pred_fallthru
        _
      %p941 = scmp.le.s32.totalorder 2, %s15
      // Predicated region
      $region87: #{tpu_custom_call.1} parent=5 // pred_check
        %p942 = pneg %p941
      $region88: #{tpu_custom_call.1} parent=5 // pred_check_branch
        %944 = sbr.rel (%p942) target = $region90
      $region89: #{tpu_custom_call.1} parent=5 // pred_region
        %s945 = ssub.s32 %s15, 2
        // Predicated region
        $region91: #{tpu_custom_call.1} parent=89 // pred_check
          %p946 = pneg %p154
        $region92: #{tpu_custom_call.1} parent=89 // pred_check_branch
          %948 = sbr.rel (%p946) target = $region94
        $region93: #{tpu_custom_call.1} parent=89 // pred_region
          %s949 = sand.u32 %s139, 1
          %s950 = scalar_lea.sflag [#allocation5], %s949
          %s951 = sand.u32 %s139, 1
          %s952 = smul.addr %s951, 64
          %s953 = scalar_lea.vmem [#allocation6], %s952
          %954 = dma.done %s950, 1024
        $region94: #{tpu_custom_call.1} parent=89 // pred_fallthru
          _
      $region90: #{tpu_custom_call.1} parent=5 // pred_fallthru
        _
    $region6: #{tpu_custom_call.1} parent=1 // loop_footer
      %s19 = sadd.s32 1, %s15
    $region7: #{tpu_custom_call.1} parent=1 // loop_footer_branch
      %14 = sbr.rel target = $region3
    $region8: #{tpu_custom_call.1} parent=1 // loop_exit
      _
    %955 = vsyncpa [#allocation4], 1
    %s956 = scalar_lea.sflag [#allocation4], 1
    %957 = vsyncpa %s956, 1
    %958 = vsyncpa [#allocation5], 1
    %s959 = scalar_lea.sflag [#allocation5], 1
    %960 = vsyncpa %s959, 1

</llo_original>
